<compile_context>
chip_gen: v5e
topology: v5e:2x2
jax: 0.10.0
libtpu: 0.0.40
codegen_flags: <defaults>
</compile_context>

<pallas_src>
import functools
import math

import jax
import jax.numpy as jnp
from jax import lax
from jax.experimental import pallas as pl
from jax.experimental.pallas import tpu as pltpu


# ----------------------------------------------------------------------------
# Glue: SeqAllToAll4D.  With sp world size == 1 the all-to-all is identity.
# TODO(synk): multi-device Ulysses all-to-all would use shard_map + remote DMA
# (pltpu.make_async_remote_copy); not needed for the single-process kernel.
# ----------------------------------------------------------------------------
def seq_all_to_all_4d(x, scatter_idx, gather_idx, sp_size=1):
    del scatter_idx, gather_idx
    assert sp_size == 1
    return x


# ----------------------------------------------------------------------------
# Flash-attention forward kernel: one (batch*head, q-tile) pair, iterating
# over kv tiles along the last (arbitrary) grid axis with online softmax.
# Refs: q (1, tq, D), k/v (1, tkv, D), o (1, tq, D);
# scratch: m (tq, 1), l (tq, 1), acc (tq, D), all f32.
# ----------------------------------------------------------------------------
def _flash_kernel(q_ref, k_ref, v_ref, o_ref, m_scr, l_scr, acc_scr, *, scale):
    kv = pl.program_id(2)

    @pl.when(kv == 0)
    def _init():
        m_scr[...] = jnp.full(m_scr.shape, -jnp.inf, dtype=m_scr.dtype)
        l_scr[...] = jnp.zeros(l_scr.shape, dtype=l_scr.dtype)
        acc_scr[...] = jnp.zeros(acc_scr.shape, dtype=acc_scr.dtype)

    # Fold the softmax scale into the (tq, D) q tile (cheaper than scaling
    # the (tq, tkv) score matrix, and done once per kv step on a small tile).
    q = q_ref[0] * scale                      # (tq, D), input dtype
    k = k_ref[0]                              # (tkv, D), input dtype
    v = v_ref[0]                              # (tkv, D), input dtype

    # scores = q @ k^T, contracting the last axes directly (no explicit k.T,
    # so no XLU transpose of the K tile).  f32 accumulation on the MXU.
    s = lax.dot_general(
        q, k, (((1,), (1,)), ((), ())),
        preferred_element_type=jnp.float32)   # (tq, tkv) f32

    # Online softmax update.
    m_prev = m_scr[...]                                       # (tq, 1)
    m_new = jnp.maximum(m_prev, jnp.max(s, axis=-1, keepdims=True))
    alpha = jnp.exp(m_prev - m_new)                           # (tq, 1)
    p = jnp.exp(s - m_new)                                    # (tq, tkv) f32

    l_scr[...] = alpha * l_scr[...] + jnp.sum(p, axis=-1, keepdims=True)
    acc_scr[...] = alpha * acc_scr[...] + jnp.dot(
        p.astype(v.dtype), v, preferred_element_type=jnp.float32)
    m_scr[...] = m_new

    @pl.when(kv == pl.num_programs(2) - 1)
    def _finalize():
        inv_l = pl.reciprocal(l_scr[...], approx=True)        # EUP vrcp
        o_ref[0] = (acc_scr[...] * inv_l).astype(o_ref.dtype)


def _pick_block(seq_len, target):
    """Largest multiple-of-128 tile <= target that divides seq_len."""
    for cand in (target, 512, 256, 128):
        if cand <= seq_len and seq_len % cand == 0 and cand % 128 == 0:
            return cand
    return seq_len  # ragged / tiny sequence: single whole-sequence tile


def _local_attention(q_bh, k_bh, v_bh, softmax_scale, *,
                     block_q=256, block_kv=512):
    """q/k/v: [B*H, S, D] -> attention output [B*H, S, D]."""
    BH, S, D = q_bh.shape
    tq = _pick_block(S, block_q)
    tkv = _pick_block(S, block_kv)
    grid = (BH, S // tq, S // tkv)

    q_spec = pl.BlockSpec((1, tq, D), lambda b, qi, ki: (b, qi, 0))
    kv_spec = pl.BlockSpec((1, tkv, D), lambda b, qi, ki: (b, ki, 0))
    o_spec = pl.BlockSpec((1, tq, D), lambda b, qi, ki: (b, qi, 0))

    itemsize = jnp.dtype(q_bh.dtype).itemsize
    cost = pl.CostEstimate(
        flops=int(4 * BH * S * S * D),              # QK^T + PV
        transcendentals=int(BH * S * S),            # exp per score
        bytes_accessed=int(4 * BH * S * D * itemsize))

    return pl.pallas_call(
        functools.partial(_flash_kernel, scale=float(softmax_scale)),
        out_shape=jax.ShapeDtypeStruct((BH, S, D), q_bh.dtype),
        grid_spec=pltpu.PrefetchScalarGridSpec(
            num_scalar_prefetch=0,
            grid=grid,
            in_specs=[q_spec, kv_spec, kv_spec],
            out_specs=o_spec,
            scratch_shapes=[
                pltpu.VMEM((tq, 1), jnp.float32),   # running max m
                pltpu.VMEM((tq, 1), jnp.float32),   # running denom l
                pltpu.VMEM((tq, D), jnp.float32),   # output accumulator
            ]),
        compiler_params=pltpu.CompilerParams(
            dimension_semantics=("parallel", "parallel", "arbitrary")),
        cost_estimate=cost,
    )(q_bh, k_bh, v_bh)


# ----------------------------------------------------------------------------
# UlyssesAttention.forward equivalent.
# ----------------------------------------------------------------------------
def ulysses_attention(query, key, value, *, softmax_scale=None, causal=False,
                      dropout_p=0.0, scatter_idx=2, gather_idx=1,
                      block_q=256, block_kv=512):
    """query/key/value: [B, S, H, D].  Returns [B, S, H, D]."""
    # TODO(synk): causal masking, attention_mask all-reduce path, dropout and
    # window_size/alibi are not exercised by the default forward args.
    assert not causal
    assert dropout_p == 0.0

    # all-to-all on q, k, v (identity for sp world size == 1)
    q = seq_all_to_all_4d(query, scatter_idx, gather_idx)
    k = seq_all_to_all_4d(key, scatter_idx, gather_idx)
    v = seq_all_to_all_4d(value, scatter_idx, gather_idx)

    B, S, H, D = q.shape
    if softmax_scale is None:
        softmax_scale = 1.0 / math.sqrt(D)

    # [B, S, H, D] -> [B*H, S, D] so every kernel block is a legal (t, D) tile.
    def to_bh(x):
        return jnp.transpose(x, (0, 2, 1, 3)).reshape(B * H, S, D)

    ctx = _local_attention(to_bh(q), to_bh(k), to_bh(v), softmax_scale,
                           block_q=block_q, block_kv=block_kv)

    # [B*H, S, D] -> [B, S, H, D]
    context_layer = jnp.transpose(ctx.reshape(B, H, S, D), (0, 2, 1, 3))

    # reverse all-to-all (identity for sp world size == 1)
    output = seq_all_to_all_4d(context_layer, gather_idx, scatter_idx)
    return output


# ----------------------------------------------------------------------------
# Pure-JAX reference for correctness checking.
# ----------------------------------------------------------------------------
def _reference(query, key, value, softmax_scale=None):
    D = query.shape[-1]
    if softmax_scale is None:
        softmax_scale = 1.0 / math.sqrt(D)
    q = query.astype(jnp.float32)
    k = key.astype(jnp.float32)
    v = value.astype(jnp.float32)
    s = jnp.einsum("bqhd,bkhd->bhqk", q, k) * softmax_scale
    p = jax.nn.softmax(s, axis=-1)
    o = jnp.einsum("bhqk,bkhd->bqhd", p, v)
    return o.astype(query.dtype)


if __name__ == "__main__":
    # Small, deterministic inputs: batch=2, seq=128, heads=4, head_dim=64.
    B, S, H, D = 2, 128, 4, 64
    key0 = jax.random.PRNGKey(0)
    kq, kk, kv = jax.random.split(key0, 3)
    query = jax.random.normal(kq, (B, S, H, D), dtype=jnp.float32)
    key_ = jax.random.normal(kk, (B, S, H, D), dtype=jnp.float32)
    value = jax.random.normal(kv, (B, S, H, D), dtype=jnp.float32)

    out = ulysses_attention(query, key_, value)
    out = jax.block_until_ready(out)

    ref = _reference(query, key_, value)
    assert out.shape == (B, S, H, D)
    # Tolerance covers the single approx (EUP) reciprocal used at finalize;
    # everything else accumulates in f32.
    assert jnp.allclose(out, ref, atol=5e-3, rtol=5e-3), "mismatch vs reference"

    print("KERNEL_OK")
</pallas_src>

<mosaic_0001>
module attributes {stable_mosaic.version = 11 : i64} {
  func.func @_flash_kernel(%arg0: i32, %arg1: i32, %arg2: i32, %arg3: memref<1x128x64xf32, #tpu.memory_space<vmem>>, %arg4: memref<1x128x64xf32, #tpu.memory_space<vmem>>, %arg5: memref<1x128x64xf32, #tpu.memory_space<vmem>>, %arg6: memref<1x128x64xf32, #tpu.memory_space<vmem>>, %arg7: memref<128x1xf32, #tpu.memory_space<vmem>>, %arg8: memref<128x1xf32, #tpu.memory_space<vmem>>, %arg9: memref<128x64xf32, #tpu.memory_space<vmem>>) attributes {dimension_semantics = [#tpu.dimension_semantics<parallel>, #tpu.dimension_semantics<parallel>, #tpu.dimension_semantics<arbitrary>], iteration_bounds = array<i64: 8, 1, 1>, scalar_prefetch = 0 : i64, scratch_operands = 3 : i64, tpu.core_type = #tpu.core_type<tc>, window_params = [{transform_indices = @transform_0, window_bounds = array<i64: 1, 128, 64>}, {transform_indices = @transform_1, window_bounds = array<i64: 1, 128, 64>}, {transform_indices = @transform_2, window_bounds = array<i64: 1, 128, 64>}, {transform_indices = @transform_3, window_bounds = array<i64: 1, 128, 64>}]} {
    %c0_i32 = arith.constant 0 : i32
    %0 = arith.cmpi eq, %arg2, %c0_i32 : i32
    %1 = arith.extui %0 : i1 to i32
    %c0_i32_0 = arith.constant 0 : i32
    %2 = arith.cmpi ne, %1, %c0_i32_0 : i32
    scf.if %2 {
      %cst_27 = arith.constant 0xFF800000 : f32
      %37 = vector.broadcast %cst_27 : f32 to vector<128x1xf32>
      %c0_28 = arith.constant 0 : index
      %c0_29 = arith.constant 0 : index
      %38 = vector.load %arg7[%c0_28, %c0_29] : memref<128x1xf32, #tpu.memory_space<vmem>>, vector<128x1xf32>
      tpu.vector_store %arg7[%c0_28, %c0_29], %37 {strides = array<i32>} : memref<128x1xf32, #tpu.memory_space<vmem>>, vector<128x1xf32>,
      %cst_30 = arith.constant 0.000000e+00 : f32
      %39 = vector.broadcast %cst_30 : f32 to vector<128x1xf32>
      %c0_31 = arith.constant 0 : index
      %c0_32 = arith.constant 0 : index
      %40 = vector.load %arg8[%c0_31, %c0_32] : memref<128x1xf32, #tpu.memory_space<vmem>>, vector<128x1xf32>
      tpu.vector_store %arg8[%c0_31, %c0_32], %39 {strides = array<i32>} : memref<128x1xf32, #tpu.memory_space<vmem>>, vector<128x1xf32>,
      %cst_33 = arith.constant 0.000000e+00 : f32
      %41 = vector.broadcast %cst_33 : f32 to vector<128x64xf32>
      %c0_34 = arith.constant 0 : index
      %c0_35 = arith.constant 0 : index
      %42 = vector.load %arg9[%c0_34, %c0_35] : memref<128x64xf32, #tpu.memory_space<vmem>>, vector<128x64xf32>
      tpu.vector_store %arg9[%c0_34, %c0_35], %41 {strides = array<i32>} : memref<128x64xf32, #tpu.memory_space<vmem>>, vector<128x64xf32>,
    } else {
    }
    %c0 = arith.constant 0 : index
    %c0_1 = arith.constant 0 : index
    %c0_2 = arith.constant 0 : index
    %3 = vector.load %arg3[%c0, %c0_1, %c0_2] : memref<1x128x64xf32, #tpu.memory_space<vmem>>, vector<1x128x64xf32>
    %4 = vector.shape_cast %3 : vector<1x128x64xf32> to vector<128x64xf32>
    %cst = arith.constant 1.250000e-01 : f32
    %5 = vector.broadcast %cst : f32 to vector<128x64xf32>
    %6 = arith.mulf %4, %5 : vector<128x64xf32>
    %c0_3 = arith.constant 0 : index
    %c0_4 = arith.constant 0 : index
    %c0_5 = arith.constant 0 : index
    %7 = vector.load %arg4[%c0_3, %c0_4, %c0_5] : memref<1x128x64xf32, #tpu.memory_space<vmem>>, vector<1x128x64xf32>
    %8 = vector.shape_cast %7 : vector<1x128x64xf32> to vector<128x64xf32>
    %c0_6 = arith.constant 0 : index
    %c0_7 = arith.constant 0 : index
    %c0_8 = arith.constant 0 : index
    %9 = vector.load %arg5[%c0_6, %c0_7, %c0_8] : memref<1x128x64xf32, #tpu.memory_space<vmem>>, vector<1x128x64xf32>
    %10 = vector.shape_cast %9 : vector<1x128x64xf32> to vector<128x64xf32>
    %cst_9 = arith.constant dense<0.000000e+00> : vector<128x128xf32>
    %11 = tpu.matmul %6, %8, %cst_9 {dimension_numbers = #tpu.dot_dimension_numbers<[1], [1], [0], [0], [0, 0, 1, 0], [], []>} : vector<128x64xf32>, vector<128x64xf32>, vector<128x128xf32> -> vector<128x128xf32>
    %c0_10 = arith.constant 0 : index
    %c0_11 = arith.constant 0 : index
    %12 = vector.load %arg7[%c0_10, %c0_11] : memref<128x1xf32, #tpu.memory_space<vmem>>, vector<128x1xf32>
    %cst_12 = arith.constant dense<0xFF800000> : vector<128xf32>
    %13 = vector.multi_reduction <maximumf>, %11, %cst_12 [1] : vector<128x128xf32> to vector<128xf32>
    %14 = vector.shape_cast %13 : vector<128xf32> to vector<128x1xf32>
    %15 = arith.maximumf %12, %14 : vector<128x1xf32>
    %16 = arith.subf %12, %15 : vector<128x1xf32>
    %17 = math.exp %16 : vector<128x1xf32>
    %18 = vector.broadcast %15 : vector<128x1xf32> to vector<128x128xf32>
    %19 = arith.subf %11, %18 : vector<128x128xf32>
    %20 = math.exp %19 : vector<128x128xf32>
    %c0_13 = arith.constant 0 : index
    %c0_14 = arith.constant 0 : index
    %21 = vector.load %arg8[%c0_13, %c0_14] : memref<128x1xf32, #tpu.memory_space<vmem>>, vector<128x1xf32>
    %22 = arith.mulf %17, %21 : vector<128x1xf32>
    %cst_15 = arith.constant dense<0.000000e+00> : vector<128xf32>
    %23 = vector.multi_reduction <add>, %20, %cst_15 [1] : vector<128x128xf32> to vector<128xf32>
    %24 = vector.shape_cast %23 : vector<128xf32> to vector<128x1xf32>
    %25 = arith.addf %22, %24 : vector<128x1xf32>
    %c0_16 = arith.constant 0 : index
    %c0_17 = arith.constant 0 : index
    %26 = vector.load %arg8[%c0_16, %c0_17] : memref<128x1xf32, #tpu.memory_space<vmem>>, vector<128x1xf32>
    tpu.vector_store %arg8[%c0_16, %c0_17], %25 {strides = array<i32>} : memref<128x1xf32, #tpu.memory_space<vmem>>, vector<128x1xf32>,
    %c0_18 = arith.constant 0 : index
    %c0_19 = arith.constant 0 : index
    %27 = vector.load %arg9[%c0_18, %c0_19] : memref<128x64xf32, #tpu.memory_space<vmem>>, vector<128x64xf32>
    %28 = vector.broadcast %17 : vector<128x1xf32> to vector<128x64xf32>
    %29 = arith.mulf %28, %27 : vector<128x64xf32>
    %cst_20 = arith.constant dense<0.000000e+00> : vector<128x64xf32>
    %30 = tpu.matmul %20, %10, %cst_20 {dimension_numbers = #tpu.dot_dimension_numbers<[1], [0], [0], [1], [0, 0, 1, 1], [], []>} : vector<128x128xf32>, vector<128x64xf32>, vector<128x64xf32> -> vector<128x64xf32>
    %31 = arith.addf %29, %30 : vector<128x64xf32>
    %c0_21 = arith.constant 0 : index
    %c0_22 = arith.constant 0 : index
    %32 = vector.load %arg9[%c0_21, %c0_22] : memref<128x64xf32, #tpu.memory_space<vmem>>, vector<128x64xf32>
    tpu.vector_store %arg9[%c0_21, %c0_22], %31 {strides = array<i32>} : memref<128x64xf32, #tpu.memory_space<vmem>>, vector<128x64xf32>,
    %c0_23 = arith.constant 0 : index
    %c0_24 = arith.constant 0 : index
    %33 = vector.load %arg7[%c0_23, %c0_24] : memref<128x1xf32, #tpu.memory_space<vmem>>, vector<128x1xf32>
    tpu.vector_store %arg7[%c0_23, %c0_24], %15 {strides = array<i32>} : memref<128x1xf32, #tpu.memory_space<vmem>>, vector<128x1xf32>,
    %c0_i32_25 = arith.constant 0 : i32
    %34 = arith.cmpi eq, %arg2, %c0_i32_25 : i32
    %35 = arith.extui %34 : i1 to i32
    %c0_i32_26 = arith.constant 0 : i32
    %36 = arith.cmpi ne, %35, %c0_i32_26 : i32
    scf.if %36 {
      %c0_27 = arith.constant 0 : index
      %c0_28 = arith.constant 0 : index
      %37 = vector.load %arg8[%c0_27, %c0_28] : memref<128x1xf32, #tpu.memory_space<vmem>>, vector<128x1xf32>
      %38 = tpu.reciprocal %37 {approx = true} : vector<128x1xf32> -> vector<128x1xf32>
      %c0_29 = arith.constant 0 : index
      %c0_30 = arith.constant 0 : index
      %39 = vector.load %arg9[%c0_29, %c0_30] : memref<128x64xf32, #tpu.memory_space<vmem>>, vector<128x64xf32>
      %40 = vector.broadcast %38 : vector<128x1xf32> to vector<128x64xf32>
      %41 = arith.mulf %39, %40 : vector<128x64xf32>
      %c0_31 = arith.constant 0 : index
      %c0_32 = arith.constant 0 : index
      %c0_33 = arith.constant 0 : index
      %42 = vector.load %arg6[%c0_31, %c0_32, %c0_33] : memref<1x128x64xf32, #tpu.memory_space<vmem>>, vector<1x128x64xf32>
      %43 = vector.shape_cast %42 : vector<1x128x64xf32> to vector<128x64xf32>
      %44 = vector.shape_cast %41 : vector<128x64xf32> to vector<1x128x64xf32>
      tpu.vector_store %arg6[%c0_31, %c0_32, %c0_33], %44 {strides = array<i32>} : memref<1x128x64xf32, #tpu.memory_space<vmem>>, vector<1x128x64xf32>,
    } else {
    }
    return
  }
  func.func @transform_0(%arg0: i32, %arg1: i32, %arg2: i32) -> (i32, i32, i32) {
    %c0_i32 = arith.constant 0 : i32
    %c0_i32_0 = arith.constant 0 : i32
    return %arg0, %arg1, %c0_i32 : i32, i32, i32
  }
  func.func @transform_1(%arg0: i32, %arg1: i32, %arg2: i32) -> (i32, i32, i32) {
    %c0_i32 = arith.constant 0 : i32
    %c0_i32_0 = arith.constant 0 : i32
    return %arg0, %arg2, %c0_i32 : i32, i32, i32
  }
  func.func @transform_2(%arg0: i32, %arg1: i32, %arg2: i32) -> (i32, i32, i32) {
    %c0_i32 = arith.constant 0 : i32
    %c0_i32_0 = arith.constant 0 : i32
    return %arg0, %arg2, %c0_i32 : i32, i32, i32
  }
  func.func @transform_3(%arg0: i32, %arg1: i32, %arg2: i32) -> (i32, i32, i32) {
    %c0_i32 = arith.constant 0 : i32
    %c0_i32_0 = arith.constant 0 : i32
    return %arg0, %arg1, %c0_i32 : i32, i32, i32
  }
}

</mosaic_0001>

<llo_original>
// kernel: tpu_custom_call.1
$region0: #{tpu_custom_call.1}
  #allocation0 [shape = 'u32[]', space=smem, size = 0x4, offset = 0x4, fixed_abs, tag = 'smem constant byte address 0x4 - core index']
  #allocation1 [shape = 'u32[72,128]{1,0:T(1,128)}', space=vmem, size = 0x9000, scoped, tag = 'internal scratch']
  #allocation2 [shape = 'f32[128,1]{1,0:T(8,128)}', space=vmem, size = 0x10000, scoped, tag = 'scratch operand']
  #allocation3 [shape = 'f32[128,1]{1,0:T(8,128)}', space=vmem, size = 0x10000, scoped, tag = 'scratch operand']
  #allocation4 [shape = 'f32[128,64]{1,0:T(8,128)}', space=vmem, size = 0x10000, scoped, tag = 'scratch operand']
  %s0 = inlined_call_operand.vmem [shape: f32[8,128,64], index: 0, kind: input, shape index: {}]
  %s1 = inlined_call_operand.vmem [shape: f32[8,128,64], index: 1, kind: input, shape index: {}]
  %s2 = inlined_call_operand.vmem [shape: f32[8,128,64], index: 2, kind: input, shape index: {}]
  %s3 = inlined_call_operand.vmem [shape: f32[8,128,64], index: 3, kind: output, shape index: {}]
  %s4 = sld [smem:[#allocation0]]
  $region53: #{tpu_custom_call.1} parent=0
    _
  %s6 = ssub.s32 1, %s4
  %s7 = scalar_select 0, %s6, %s4
  loop: start=0, step=1, limit=10
  $region2: #{tpu_custom_call.1} parent=0 // loop_pre_header
    _
  $region3: #{tpu_custom_call.1} parent=0 // loop_header
    %s9 = sphi 0, %s13
    %p10 = scmp.ge.s32.totalorder %s9, 10
    %s16 = sphi 0, %s35
    %s17 = sphi 0, %s31
    %s18 = sphi 0, %s27
    %s19 = sphi 0, %s16
    %s20 = sphi 0, %s17
    %s21 = sphi 0, %s18
    %s22 = sphi 0, %s19
    %s23 = sphi 0, %s20
    %s24 = sphi 0, %s21
    %s40 = sphi 0, %s42
    %s43 = sphi 0, %s40
    %s44 = sphi 0, %s43
    %s60 = sphi 0, %s44
    %s68 = sphi 0, %s70
    %s71 = sphi 0, %s68
    %s72 = sphi 0, %s71
    %s88 = sphi 0, %s72
    %s96 = sphi 0, %s98
    %s99 = sphi 0, %s96
    %s100 = sphi 0, %s99
    %s116 = sphi 0, %s100
    %s124 = sphi 0, %s126
    %s127 = sphi 0, %s124
    %s128 = sphi 0, %s127
    %s144 = sphi 0, %s128
  $region4: #{tpu_custom_call.1} parent=0 // loop_header_branch
    %12 = sbr.rel (%p10) target = $region8
  $region5: #{tpu_custom_call.1} parent=0 // loop_body
    %s14 = ssub.s32 %s9, 1
    %s15 = ssub.s32 %s9, 2
    %s25 = sadd.s32 1, %s18
    %p26 = scmp.ge.s32.totalorder %s25, 1
    %s27 = scalar_select %p26, 0, %s25
    %s28 = sadd.s32 1, %s17
    %s29 = scalar_select %p26, %s28, %s17
    %p30 = scmp.ge.s32.totalorder %s29, 1
    %s31 = scalar_select %p30, 0, %s29
    %s32 = sadd.s32 1, %s16
    %s33 = scalar_select %p30, %s32, %s16
    %p34 = scmp.ge.s32.totalorder %s33, 8
    %s35 = scalar_select %p34, 0, %s33
    %s36 = ssub.s32 %s16, %s35
    %s37 = ssub.s32 %s17, %s31
    %s38 = sor.u32 %s36, %s37
    %p39 = scmp.eq.s32.totalorder %s38, 0
    %s41 = sadd.s32 %s40, 1
    %s42 = scalar_select %p39, %s40, %s41
    %p45 = pneg %p39
    %p46 = scmp.eq.s32.totalorder %s9, 7
    %p47 = por %p45, %p46
    %p48 = scmp.ne.s32.totalorder %s40, %s43
    %p49 = scmp.eq.s32.totalorder %s9, 0
    %p50 = por %p48, %p49
    %p51 = scmp.ne.s32.totalorder %s40, %s43
    %p52 = scmp.eq.s32.totalorder %s14, 7
    %p53 = por %p51, %p52
    %p54 = scmp.ne.s32.totalorder %s43, %s44
    %p55 = scmp.eq.s32.totalorder %s14, 0
    %p56 = por %p54, %p55
    %p57 = scmp.ne.s32.totalorder %s43, %s44
    %p58 = scmp.eq.s32.totalorder %s15, 7
    %p59 = por %p57, %p58
    %p61 = scmp.ne.s32.totalorder %s44, %s60
    %p62 = scmp.eq.s32.totalorder %s15, 0
    %p63 = por %p61, %p62
    %s64 = ssub.s32 %s16, %s35
    %s65 = ssub.s32 %s18, %s27
    %s66 = sor.u32 %s64, %s65
    %p67 = scmp.eq.s32.totalorder %s66, 0
    %s69 = sadd.s32 %s68, 1
    %s70 = scalar_select %p67, %s68, %s69
    %p73 = pneg %p67
    %p74 = scmp.eq.s32.totalorder %s9, 7
    %p75 = por %p73, %p74
    %p76 = scmp.ne.s32.totalorder %s68, %s71
    %p77 = scmp.eq.s32.totalorder %s9, 0
    %p78 = por %p76, %p77
    %p79 = scmp.ne.s32.totalorder %s68, %s71
    %p80 = scmp.eq.s32.totalorder %s14, 7
    %p81 = por %p79, %p80
    %p82 = scmp.ne.s32.totalorder %s71, %s72
    %p83 = scmp.eq.s32.totalorder %s14, 0
    %p84 = por %p82, %p83
    %p85 = scmp.ne.s32.totalorder %s71, %s72
    %p86 = scmp.eq.s32.totalorder %s15, 7
    %p87 = por %p85, %p86
    %p89 = scmp.ne.s32.totalorder %s72, %s88
    %p90 = scmp.eq.s32.totalorder %s15, 0
    %p91 = por %p89, %p90
    %s92 = ssub.s32 %s16, %s35
    %s93 = ssub.s32 %s18, %s27
    %s94 = sor.u32 %s92, %s93
    %p95 = scmp.eq.s32.totalorder %s94, 0
    %s97 = sadd.s32 %s96, 1
    %s98 = scalar_select %p95, %s96, %s97
    %p101 = pneg %p95
    %p102 = scmp.eq.s32.totalorder %s9, 7
    %p103 = por %p101, %p102
    %p104 = scmp.ne.s32.totalorder %s96, %s99
    %p105 = scmp.eq.s32.totalorder %s9, 0
    %p106 = por %p104, %p105
    %p107 = scmp.ne.s32.totalorder %s96, %s99
    %p108 = scmp.eq.s32.totalorder %s14, 7
    %p109 = por %p107, %p108
    %p110 = scmp.ne.s32.totalorder %s99, %s100
    %p111 = scmp.eq.s32.totalorder %s14, 0
    %p112 = por %p110, %p111
    %p113 = scmp.ne.s32.totalorder %s99, %s100
    %p114 = scmp.eq.s32.totalorder %s15, 7
    %p115 = por %p113, %p114
    %p117 = scmp.ne.s32.totalorder %s100, %s116
    %p118 = scmp.eq.s32.totalorder %s15, 0
    %p119 = por %p117, %p118
    %s120 = ssub.s32 %s16, %s35
    %s121 = ssub.s32 %s17, %s31
    %s122 = sor.u32 %s120, %s121
    %p123 = scmp.eq.s32.totalorder %s122, 0
    %s125 = sadd.s32 %s124, 1
    %s126 = scalar_select %p123, %s124, %s125
    %p129 = pneg %p123
    %p130 = scmp.eq.s32.totalorder %s9, 7
    %p131 = por %p129, %p130
    %p132 = scmp.ne.s32.totalorder %s124, %s127
    %p133 = scmp.eq.s32.totalorder %s9, 0
    %p134 = por %p132, %p133
    %p135 = scmp.ne.s32.totalorder %s124, %s127
    %p136 = scmp.eq.s32.totalorder %s14, 7
    %p137 = por %p135, %p136
    %p138 = scmp.ne.s32.totalorder %s127, %s128
    %p139 = scmp.eq.s32.totalorder %s14, 0
    %p140 = por %p138, %p139
    %p141 = scmp.ne.s32.totalorder %s127, %s128
    %p142 = scmp.eq.s32.totalorder %s15, 7
    %p143 = por %p141, %p142
    %p145 = scmp.ne.s32.totalorder %s128, %s144
    %p146 = scmp.eq.s32.totalorder %s15, 0
    %p147 = por %p145, %p146
    %p148 = scmp.le.s32.totalorder 1, %s9
    %p149 = scmp.lt.s32.totalorder %s9, 9
    %p150 = pnand %p148, %p149
    %p151 = pneg %p150
    // Predicated region
    $region9: #{tpu_custom_call.1} parent=5 // pred_check
      _
    $region10: #{tpu_custom_call.1} parent=5 // pred_check_branch
      %153 = sbr.rel (%p150) target = $region12
    $region11: #{tpu_custom_call.1} parent=5 // pred_region
      %s154 = ssub.s32 %s9, 1
    $region12: #{tpu_custom_call.1} parent=5 // pred_fallthru
      _
    %p155 = scmp.lt.s32.totalorder %s9, 8
    // Predicated region
    $region13: #{tpu_custom_call.1} parent=5 // pred_check
      %p156 = pneg %p155
    $region14: #{tpu_custom_call.1} parent=5 // pred_check_branch
      %158 = sbr.rel (%p156) target = $region16
    $region15: #{tpu_custom_call.1} parent=5 // pred_region
      // Predicated region
      $region17: #{tpu_custom_call.1} parent=15 // pred_check
        %p159 = pneg %p50
      $region18: #{tpu_custom_call.1} parent=15 // pred_check_branch
        %161 = sbr.rel (%p159) target = $region20
      $region19: #{tpu_custom_call.1} parent=15 // pred_region
        %s162 = smul.u32 16, %s17
        %p163 = scmp.lt.s32.totalorder %s16, 7
        %s164 = scalar_select %p163, %s16, 7
        %p165 = scmp.lt.s32.totalorder %s162, 15
        %s166 = scalar_select %p165, %s162, 15
        %s167 = smul.addr %s164, 16
        %s168 = sadd.s32 %s166, %s167
        %s169 = smul.addr %s168, 8
        %s170 = scalar_lea.vmem %s0, %s169
        %s171 = smul.u32 16, %s17
      $region20: #{tpu_custom_call.1} parent=15 // pred_fallthru
        _
      // Predicated region
      $region21: #{tpu_custom_call.1} parent=15 // pred_check
        %p172 = pneg %p78
      $region22: #{tpu_custom_call.1} parent=15 // pred_check_branch
        %174 = sbr.rel (%p172) target = $region24
      $region23: #{tpu_custom_call.1} parent=15 // pred_region
        %s175 = smul.u32 16, %s18
        %p176 = scmp.lt.s32.totalorder %s16, 7
        %s177 = scalar_select %p176, %s16, 7
        %p178 = scmp.lt.s32.totalorder %s175, 15
        %s179 = scalar_select %p178, %s175, 15
        %s180 = smul.addr %s177, 16
        %s181 = sadd.s32 %s179, %s180
        %s182 = smul.addr %s181, 8
        %s183 = scalar_lea.vmem %s1, %s182
        %s184 = smul.u32 16, %s18
      $region24: #{tpu_custom_call.1} parent=15 // pred_fallthru
        _
      // Predicated region
      $region25: #{tpu_custom_call.1} parent=15 // pred_check
        %p185 = pneg %p106
      $region26: #{tpu_custom_call.1} parent=15 // pred_check_branch
        %187 = sbr.rel (%p185) target = $region28
      $region27: #{tpu_custom_call.1} parent=15 // pred_region
        %s188 = smul.u32 16, %s18
        %p189 = scmp.lt.s32.totalorder %s16, 7
        %s190 = scalar_select %p189, %s16, 7
        %p191 = scmp.lt.s32.totalorder %s188, 15
        %s192 = scalar_select %p191, %s188, 15
        %s193 = smul.addr %s190, 16
        %s194 = sadd.s32 %s192, %s193
        %s195 = smul.addr %s194, 8
        %s196 = scalar_lea.vmem %s2, %s195
        %s197 = smul.u32 16, %s18
      $region28: #{tpu_custom_call.1} parent=15 // pred_fallthru
        _
    $region16: #{tpu_custom_call.1} parent=5 // pred_fallthru
      _
    %p198 = scmp.le.s32.totalorder 1, %s9
    %p199 = scmp.lt.s32.totalorder %s9, 9
    %p200 = pnand %p198, %p199
    %p201 = pneg %p200
    // Predicated region
    $region29: #{tpu_custom_call.1} parent=5 // pred_check
      _
    $region30: #{tpu_custom_call.1} parent=5 // pred_check_branch
      %203 = sbr.rel (%p200) target = $region32
    $region31: #{tpu_custom_call.1} parent=5 // pred_region
      %s204 = ssub.s32 %s9, 1
      %s205 = smul.u32 16, %s20
      %p206 = scmp.lt.s32.totalorder %s19, 7
      %s207 = scalar_select %p206, %s19, 7
      %p208 = scmp.lt.s32.totalorder %s205, 15
      %s209 = scalar_select %p208, %s205, 15
      %s210 = smul.addr %s207, 16
      %s211 = sadd.s32 %s209, %s210
      %s212 = smul.addr %s211, 8
      %s213 = scalar_lea.vmem %s0, %s212
      %p214 = pneg %p56
      %p215 = pneg %p53
      %s216 = smul.u32 16, %s21
      %p217 = scmp.lt.s32.totalorder %s19, 7
      %s218 = scalar_select %p217, %s19, 7
      %p219 = scmp.lt.s32.totalorder %s216, 15
      %s220 = scalar_select %p219, %s216, 15
      %s221 = smul.addr %s218, 16
      %s222 = sadd.s32 %s220, %s221
      %s223 = smul.addr %s222, 8
      %s224 = scalar_lea.vmem %s1, %s223
      %p225 = pneg %p84
      %p226 = pneg %p81
      %s227 = smul.u32 16, %s21
      %p228 = scmp.lt.s32.totalorder %s19, 7
      %s229 = scalar_select %p228, %s19, 7
      %p230 = scmp.lt.s32.totalorder %s227, 15
      %s231 = scalar_select %p230, %s227, 15
      %s232 = smul.addr %s229, 16
      %s233 = sadd.s32 %s231, %s232
      %s234 = smul.addr %s233, 8
      %s235 = scalar_lea.vmem %s2, %s234
      %p236 = pneg %p112
      %p237 = pneg %p109
      %p238 = pneg %p140
      %p239 = pneg %p137
      %s240 = smul.u32 16, %s20
      %p241 = scmp.lt.s32.totalorder %s19, 7
      %s242 = scalar_select %p241, %s19, 7
      %p243 = scmp.lt.s32.totalorder %s240, 15
      %s244 = scalar_select %p243, %s240, 15
      %s245 = smul.addr %s242, 16
      %s246 = sadd.s32 %s244, %s245
      %s247 = smul.addr %s246, 8
      %s248 = scalar_lea.vmem %s3, %s247
      %s249 = smul.u32 16, %s20
      %p250 = scmp.lt.s32.totalorder %s19, 7
      %s251 = scalar_select %p250, %s19, 7
      %p252 = scmp.lt.s32.totalorder %s249, 15
      %s253 = scalar_select %p252, %s249, 15
      %s254 = smul.addr %s251, 16
      %s255 = sadd.s32 %s253, %s254
      %s256 = smul.addr %s255, 8
      %s257 = scalar_lea.vmem %s0, %s256
      %s258 = smul.u32 16, %s20
      %s259 = smul.u32 16, %s21
      %p260 = scmp.lt.s32.totalorder %s19, 7
      %s261 = scalar_select %p260, %s19, 7
      %p262 = scmp.lt.s32.totalorder %s259, 15
      %s263 = scalar_select %p262, %s259, 15
      %s264 = smul.addr %s261, 16
      %s265 = sadd.s32 %s263, %s264
      %s266 = smul.addr %s265, 8
      %s267 = scalar_lea.vmem %s1, %s266
      %s268 = smul.u32 16, %s21
      %s269 = smul.u32 16, %s21
      %p270 = scmp.lt.s32.totalorder %s19, 7
      %s271 = scalar_select %p270, %s19, 7
      %p272 = scmp.lt.s32.totalorder %s269, 15
      %s273 = scalar_select %p272, %s269, 15
      %s274 = smul.addr %s271, 16
      %s275 = sadd.s32 %s273, %s274
      %s276 = smul.addr %s275, 8
      %s277 = scalar_lea.vmem %s2, %s276
      %s278 = smul.u32 16, %s21
      %s279 = smul.u32 16, %s20
      %p280 = scmp.lt.s32.totalorder %s19, 7
      %s281 = scalar_select %p280, %s19, 7
      %p282 = scmp.lt.s32.totalorder %s279, 15
      %s283 = scalar_select %p282, %s279, 15
      %s284 = smul.addr %s281, 16
      %s285 = sadd.s32 %s283, %s284
      %s286 = smul.addr %s285, 8
      %s287 = scalar_lea.vmem %s3, %s286
      %s288 = smul.u32 16, %s20
      %p289 = scmp.eq.s32.totalorder %s21, 0
      // Predicated region
      $region33: #{tpu_custom_call.1} parent=31 // pred_check
        %p290 = pneg %p289
      $region34: #{tpu_custom_call.1} parent=31 // pred_check_branch
        %292 = sbr.rel (%p290) target = $region36
      $region35: #{tpu_custom_call.1} parent=31 // pred_region
        %vm293 = vcmask 7168
        %294 = vst.msk [vmem:[#allocation2] sm:$0xff] %vm293, -inf
        %295 = vst.msk [vmem:[#allocation2 + $0x8] sm:$0xff] %vm293, -inf
        %296 = vst.msk [vmem:[#allocation2 + $0x10] sm:$0xff] %vm293, -inf
        %297 = vst.msk [vmem:[#allocation2 + $0x18] sm:$0xff] %vm293, -inf
        %298 = vst.msk [vmem:[#allocation2 + $0x20] sm:$0xff] %vm293, -inf
        %299 = vst.msk [vmem:[#allocation2 + $0x28] sm:$0xff] %vm293, -inf
        %300 = vst.msk [vmem:[#allocation2 + $0x30] sm:$0xff] %vm293, -inf
        %301 = vst.msk [vmem:[#allocation2 + $0x38] sm:$0xff] %vm293, -inf
        %302 = vst.msk [vmem:[#allocation2 + $0x40] sm:$0xff] %vm293, -inf
        %303 = vst.msk [vmem:[#allocation2 + $0x48] sm:$0xff] %vm293, -inf
        %304 = vst.msk [vmem:[#allocation2 + $0x50] sm:$0xff] %vm293, -inf
        %305 = vst.msk [vmem:[#allocation2 + $0x58] sm:$0xff] %vm293, -inf
        %306 = vst.msk [vmem:[#allocation2 + $0x60] sm:$0xff] %vm293, -inf
        %307 = vst.msk [vmem:[#allocation2 + $0x68] sm:$0xff] %vm293, -inf
        %308 = vst.msk [vmem:[#allocation2 + $0x70] sm:$0xff] %vm293, -inf
        %309 = vst.msk [vmem:[#allocation2 + $0x78] sm:$0xff] %vm293, -inf
        %310 = vst.msk [vmem:[#allocation3] sm:$0xff] %vm293, 0.0
        %311 = vst.msk [vmem:[#allocation3 + $0x8] sm:$0xff] %vm293, 0.0
        %312 = vst.msk [vmem:[#allocation3 + $0x10] sm:$0xff] %vm293, 0.0
        %313 = vst.msk [vmem:[#allocation3 + $0x18] sm:$0xff] %vm293, 0.0
        %314 = vst.msk [vmem:[#allocation3 + $0x20] sm:$0xff] %vm293, 0.0
        %315 = vst.msk [vmem:[#allocation3 + $0x28] sm:$0xff] %vm293, 0.0
        %316 = vst.msk [vmem:[#allocation3 + $0x30] sm:$0xff] %vm293, 0.0
        %317 = vst.msk [vmem:[#allocation3 + $0x38] sm:$0xff] %vm293, 0.0
        %318 = vst.msk [vmem:[#allocation3 + $0x40] sm:$0xff] %vm293, 0.0
        %319 = vst.msk [vmem:[#allocation3 + $0x48] sm:$0xff] %vm293, 0.0
        %320 = vst.msk [vmem:[#allocation3 + $0x50] sm:$0xff] %vm293, 0.0
        %321 = vst.msk [vmem:[#allocation3 + $0x58] sm:$0xff] %vm293, 0.0
        %322 = vst.msk [vmem:[#allocation3 + $0x60] sm:$0xff] %vm293, 0.0
        %323 = vst.msk [vmem:[#allocation3 + $0x68] sm:$0xff] %vm293, 0.0
        %324 = vst.msk [vmem:[#allocation3 + $0x70] sm:$0xff] %vm293, 0.0
        %325 = vst.msk [vmem:[#allocation3 + $0x78] sm:$0xff] %vm293, 0.0
        %vm326 = vcmask 523264
        %327 = vst.msk [vmem:[#allocation4] sm:$0xff] %vm326, 0.0
        %328 = vst.msk [vmem:[#allocation4 + $0x8] sm:$0xff] %vm326, 0.0
        %329 = vst.msk [vmem:[#allocation4 + $0x10] sm:$0xff] %vm326, 0.0
        %330 = vst.msk [vmem:[#allocation4 + $0x18] sm:$0xff] %vm326, 0.0
        %331 = vst.msk [vmem:[#allocation4 + $0x20] sm:$0xff] %vm326, 0.0
        %332 = vst.msk [vmem:[#allocation4 + $0x28] sm:$0xff] %vm326, 0.0
        %333 = vst.msk [vmem:[#allocation4 + $0x30] sm:$0xff] %vm326, 0.0
        %334 = vst.msk [vmem:[#allocation4 + $0x38] sm:$0xff] %vm326, 0.0
        %335 = vst.msk [vmem:[#allocation4 + $0x40] sm:$0xff] %vm326, 0.0
        %336 = vst.msk [vmem:[#allocation4 + $0x48] sm:$0xff] %vm326, 0.0
        %337 = vst.msk [vmem:[#allocation4 + $0x50] sm:$0xff] %vm326, 0.0
        %338 = vst.msk [vmem:[#allocation4 + $0x58] sm:$0xff] %vm326, 0.0
        %339 = vst.msk [vmem:[#allocation4 + $0x60] sm:$0xff] %vm326, 0.0
        %340 = vst.msk [vmem:[#allocation4 + $0x68] sm:$0xff] %vm326, 0.0
        %341 = vst.msk [vmem:[#allocation4 + $0x70] sm:$0xff] %vm326, 0.0
        %342 = vst.msk [vmem:[#allocation4 + $0x78] sm:$0xff] %vm326, 0.0
      $region36: #{tpu_custom_call.1} parent=31 // pred_fallthru
        _
      %v343 = vld [vmem:[%s257] sm:$0xff]
      %v344 = vld [vmem:[%s257 + $0x8] sm:$0xff]
      %v345 = vld [vmem:[%s257 + $0x10] sm:$0xff]
      %v346 = vld [vmem:[%s257 + $0x18] sm:$0xff]
      %v347 = vld [vmem:[%s257 + $0x20] sm:$0xff]
      %v348 = vld [vmem:[%s257 + $0x28] sm:$0xff]
      %v349 = vld [vmem:[%s257 + $0x30] sm:$0xff]
      %v350 = vld [vmem:[%s257 + $0x38] sm:$0xff]
      %v351 = vld [vmem:[%s257 + $0x40] sm:$0xff]
      %v352 = vld [vmem:[%s257 + $0x48] sm:$0xff]
      %v353 = vld [vmem:[%s257 + $0x50] sm:$0xff]
      %v354 = vld [vmem:[%s257 + $0x58] sm:$0xff]
      %v355 = vld [vmem:[%s257 + $0x60] sm:$0xff]
      %v356 = vld [vmem:[%s257 + $0x68] sm:$0xff]
      %v357 = vld [vmem:[%s257 + $0x70] sm:$0xff]
      %v358 = vld [vmem:[%s257 + $0x78] sm:$0xff]
      %v359 = vmul.f32 %v343, 0.125
      %v360 = vmul.f32 %v344, 0.125
      %v361 = vmul.f32 %v345, 0.125
      %v362 = vmul.f32 %v346, 0.125
      %v363 = vmul.f32 %v347, 0.125
      %v364 = vmul.f32 %v348, 0.125
      %v365 = vmul.f32 %v349, 0.125
      %v366 = vmul.f32 %v350, 0.125
      %v367 = vmul.f32 %v351, 0.125
      %v368 = vmul.f32 %v352, 0.125
      %v369 = vmul.f32 %v353, 0.125
      %v370 = vmul.f32 %v354, 0.125
      %v371 = vmul.f32 %v355, 0.125
      %v372 = vmul.f32 %v356, 0.125
      %v373 = vmul.f32 %v357, 0.125
      %v374 = vmul.f32 %v358, 0.125
      %v375 = vld [vmem:[%s267] sm:$0xff]
      %v376 = vld [vmem:[%s267 + $0x8] sm:$0xff]
      %v377 = vld [vmem:[%s267 + $0x10] sm:$0xff]
      %v378 = vld [vmem:[%s267 + $0x18] sm:$0xff]
      %v379 = vld [vmem:[%s267 + $0x20] sm:$0xff]
      %v380 = vld [vmem:[%s267 + $0x28] sm:$0xff]
      %v381 = vld [vmem:[%s267 + $0x30] sm:$0xff]
      %v382 = vld [vmem:[%s267 + $0x38] sm:$0xff]
      %v383 = vld [vmem:[%s267 + $0x40] sm:$0xff]
      %v384 = vld [vmem:[%s267 + $0x48] sm:$0xff]
      %v385 = vld [vmem:[%s267 + $0x50] sm:$0xff]
      %v386 = vld [vmem:[%s267 + $0x58] sm:$0xff]
      %v387 = vld [vmem:[%s267 + $0x60] sm:$0xff]
      %v388 = vld [vmem:[%s267 + $0x68] sm:$0xff]
      %v389 = vld [vmem:[%s267 + $0x70] sm:$0xff]
      %v390 = vld [vmem:[%s267 + $0x78] sm:$0xff]
      %v391 = vld [vmem:[%s277] sm:$0xff]
      %v392 = vld [vmem:[%s277 + $0x8] sm:$0xff]
      %v393 = vld [vmem:[%s277 + $0x10] sm:$0xff]
      %v394 = vld [vmem:[%s277 + $0x18] sm:$0xff]
      %v395 = vld [vmem:[%s277 + $0x20] sm:$0xff]
      %v396 = vld [vmem:[%s277 + $0x28] sm:$0xff]
      %v397 = vld [vmem:[%s277 + $0x30] sm:$0xff]
      %v398 = vld [vmem:[%s277 + $0x38] sm:$0xff]
      %v399 = vld [vmem:[%s277 + $0x40] sm:$0xff]
      %v400 = vld [vmem:[%s277 + $0x48] sm:$0xff]
      %v401 = vld [vmem:[%s277 + $0x50] sm:$0xff]
      %v402 = vld [vmem:[%s277 + $0x58] sm:$0xff]
      %v403 = vld [vmem:[%s277 + $0x60] sm:$0xff]
      %v404 = vld [vmem:[%s277 + $0x68] sm:$0xff]
      %v405 = vld [vmem:[%s277 + $0x70] sm:$0xff]
      %v406 = vld [vmem:[%s277 + $0x78] sm:$0xff]
      %vm407 = vcmask 523264
      %v409 = vsel %vm407, %v359, 0
      %v412 = vsel %vm407, %v360, 0
      %v415 = vsel %vm407, %v361, 0
      %v418 = vsel %vm407, %v362, 0
      %v421 = vsel %vm407, %v363, 0
      %v424 = vsel %vm407, %v364, 0
      %v427 = vsel %vm407, %v365, 0
      %v430 = vsel %vm407, %v366, 0
      %v433 = vsel %vm407, %v367, 0
      %v436 = vsel %vm407, %v368, 0
      %v439 = vsel %vm407, %v369, 0
      %v442 = vsel %vm407, %v370, 0
      %v445 = vsel %vm407, %v371, 0
      %v448 = vsel %vm407, %v372, 0
      %v451 = vsel %vm407, %v373, 0
      %v454 = vsel %vm407, %v374, 0
      %v457 = vsel %vm407, %v375, 0
      %v460 = vsel %vm407, %v376, 0
      %v463 = vsel %vm407, %v377, 0
      %v466 = vsel %vm407, %v378, 0
      %v469 = vsel %vm407, %v379, 0
      %v472 = vsel %vm407, %v380, 0
      %v475 = vsel %vm407, %v381, 0
      %v478 = vsel %vm407, %v382, 0
      %v481 = vsel %vm407, %v383, 0
      %v484 = vsel %vm407, %v384, 0
      %v487 = vsel %vm407, %v385, 0
      %v490 = vsel %vm407, %v386, 0
      %v493 = vsel %vm407, %v387, 0
      %v496 = vsel %vm407, %v388, 0
      %v499 = vsel %vm407, %v389, 0
      %v502 = vsel %vm407, %v390, 0
      %504 = vmatpush.xpose.msra.mxu0 %v502
      %505 = vmatpush.xpose.msra.mxu0 %v499
      %506 = vmatpush.xpose.msra.mxu0 %v496
      %507 = vmatpush.xpose.msra.mxu0 %v493
      %508 = vmatpush.xpose.msra.mxu0 %v490
      %509 = vmatpush.xpose.msra.mxu0 %v487
      %510 = vmatpush.xpose.msra.mxu0 %v484
      %511 = vmatpush.xpose.msra.mxu0 %v481
      %512 = vmatpush.xpose.msra.mxu0 %v478
      %513 = vmatpush.xpose.msra.mxu0 %v475
      %514 = vmatpush.xpose.msra.mxu0 %v472
      %515 = vmatpush.xpose.msra.mxu0 %v469
      %516 = vmatpush.xpose.msra.mxu0 %v466
      %517 = vmatpush.xpose.msra.mxu0 %v463
      %518 = vmatpush.xpose.msra.mxu0 %v460
      %519 = vmatpush.xpose.msra.mxu0 %v457
      %520 = vmatmul.f32.gmra.mxu0 %v409
      %v521 = vpop.f32.mrf.mxu0
      %v522 = vadd.f32 0.0, %v521
      %523 = vmatmul.f32.gmra.mxu0 %v412
      %v524 = vpop.f32.mrf.mxu0
      %v525 = vadd.f32 0.0, %v524
      %526 = vmatmul.f32.gmra.mxu0 %v415
      %v527 = vpop.f32.mrf.mxu0
      %v528 = vadd.f32 0.0, %v527
      %529 = vmatmul.f32.gmra.mxu0 %v418
      %v530 = vpop.f32.mrf.mxu0
      %v531 = vadd.f32 0.0, %v530
      %532 = vmatmul.f32.gmra.mxu0 %v421
      %v533 = vpop.f32.mrf.mxu0
      %v534 = vadd.f32 0.0, %v533
      %535 = vmatmul.f32.gmra.mxu0 %v424
      %v536 = vpop.f32.mrf.mxu0
      %v537 = vadd.f32 0.0, %v536
      %538 = vmatmul.f32.gmra.mxu0 %v427
      %v539 = vpop.f32.mrf.mxu0
      %v540 = vadd.f32 0.0, %v539
      %541 = vmatmul.f32.gmra.mxu0 %v430
      %v542 = vpop.f32.mrf.mxu0
      %v543 = vadd.f32 0.0, %v542
      %544 = vmatmul.f32.gmra.mxu0 %v433
      %v545 = vpop.f32.mrf.mxu0
      %v546 = vadd.f32 0.0, %v545
      %547 = vmatmul.f32.gmra.mxu0 %v436
      %v548 = vpop.f32.mrf.mxu0
      %v549 = vadd.f32 0.0, %v548
      %550 = vmatmul.f32.gmra.mxu0 %v439
      %v551 = vpop.f32.mrf.mxu0
      %v552 = vadd.f32 0.0, %v551
      %553 = vmatmul.f32.gmra.mxu0 %v442
      %v554 = vpop.f32.mrf.mxu0
      %v555 = vadd.f32 0.0, %v554
      %556 = vmatmul.f32.gmra.mxu0 %v445
      %v557 = vpop.f32.mrf.mxu0
      %v558 = vadd.f32 0.0, %v557
      %559 = vmatmul.f32.gmra.mxu0 %v448
      %v560 = vpop.f32.mrf.mxu0
      %v561 = vadd.f32 0.0, %v560
      %562 = vmatmul.f32.gmra.mxu0 %v451
      %v563 = vpop.f32.mrf.mxu0
      %v564 = vadd.f32 0.0, %v563
      %565 = vmatmul.f32.gmra.mxu0 %v454
      %v566 = vpop.f32.mrf.mxu0
      %v567 = vadd.f32 0.0, %v566
      %568 = vdwg.mxu0
      %v569 = vld [vmem:[#allocation2] sm:$0xff]
      %v570 = vld [vmem:[#allocation2 + $0x8] sm:$0xff]
      %v571 = vld [vmem:[#allocation2 + $0x10] sm:$0xff]
      %v572 = vld [vmem:[#allocation2 + $0x18] sm:$0xff]
      %v573 = vld [vmem:[#allocation2 + $0x20] sm:$0xff]
      %v574 = vld [vmem:[#allocation2 + $0x28] sm:$0xff]
      %v575 = vld [vmem:[#allocation2 + $0x30] sm:$0xff]
      %v576 = vld [vmem:[#allocation2 + $0x38] sm:$0xff]
      %v577 = vld [vmem:[#allocation2 + $0x40] sm:$0xff]
      %v578 = vld [vmem:[#allocation2 + $0x48] sm:$0xff]
      %v579 = vld [vmem:[#allocation2 + $0x50] sm:$0xff]
      %v580 = vld [vmem:[#allocation2 + $0x58] sm:$0xff]
      %v581 = vld [vmem:[#allocation2 + $0x60] sm:$0xff]
      %v582 = vld [vmem:[#allocation2 + $0x68] sm:$0xff]
      %v583 = vld [vmem:[#allocation2 + $0x70] sm:$0xff]
      %v584 = vld [vmem:[#allocation2 + $0x78] sm:$0xff]
      %585 = vmax.xlane.f32.xlu0 %v522
      %v586 = vpop.xlane.xlu0 %585
      %587 = vmax.xlane.f32.xlu0 %v525
      %v588 = vpop.xlane.xlu0 %587
      %589 = vmax.xlane.f32.xlu0 %v528
      %v590 = vpop.xlane.xlu0 %589
      %591 = vmax.xlane.f32.xlu0 %v531
      %v592 = vpop.xlane.xlu0 %591
      %593 = vmax.xlane.f32.xlu0 %v534
      %v594 = vpop.xlane.xlu0 %593
      %595 = vmax.xlane.f32.xlu0 %v537
      %v596 = vpop.xlane.xlu0 %595
      %597 = vmax.xlane.f32.xlu0 %v540
      %v598 = vpop.xlane.xlu0 %597
      %599 = vmax.xlane.f32.xlu0 %v543
      %v600 = vpop.xlane.xlu0 %599
      %601 = vmax.xlane.f32.xlu0 %v546
      %v602 = vpop.xlane.xlu0 %601
      %603 = vmax.xlane.f32.xlu0 %v549
      %v604 = vpop.xlane.xlu0 %603
      %605 = vmax.xlane.f32.xlu0 %v552
      %v606 = vpop.xlane.xlu0 %605
      %607 = vmax.xlane.f32.xlu0 %v555
      %v608 = vpop.xlane.xlu0 %607
      %609 = vmax.xlane.f32.xlu0 %v558
      %v610 = vpop.xlane.xlu0 %609
      %611 = vmax.xlane.f32.xlu0 %v561
      %v612 = vpop.xlane.xlu0 %611
      %613 = vmax.xlane.f32.xlu0 %v564
      %v614 = vpop.xlane.xlu0 %613
      %615 = vmax.xlane.f32.xlu0 %v567
      %v616 = vpop.xlane.xlu0 %615
      %v617 = vmax.f32 %v569, %v586
      %v618 = vmax.f32 %v570, %v588
      %v619 = vmax.f32 %v571, %v590
      %v620 = vmax.f32 %v572, %v592
      %v621 = vmax.f32 %v573, %v594
      %v622 = vmax.f32 %v574, %v596
      %v623 = vmax.f32 %v575, %v598
      %v624 = vmax.f32 %v576, %v600
      %v625 = vmax.f32 %v577, %v602
      %v626 = vmax.f32 %v578, %v604
      %v627 = vmax.f32 %v579, %v606
      %v628 = vmax.f32 %v580, %v608
      %v629 = vmax.f32 %v581, %v610
      %v630 = vmax.f32 %v582, %v612
      %v631 = vmax.f32 %v583, %v614
      %v632 = vmax.f32 %v584, %v616
      %v633 = vsub.f32 %v569, %v617
      %v634 = vsub.f32 %v570, %v618
      %v635 = vsub.f32 %v571, %v619
      %v636 = vsub.f32 %v572, %v620
      %v637 = vsub.f32 %v573, %v621
      %v638 = vsub.f32 %v574, %v622
      %v639 = vsub.f32 %v575, %v623
      %v640 = vsub.f32 %v576, %v624
      %v641 = vsub.f32 %v577, %v625
      %v642 = vsub.f32 %v578, %v626
      %v643 = vsub.f32 %v579, %v627
      %v644 = vsub.f32 %v580, %v628
      %v645 = vsub.f32 %v581, %v629
      %v646 = vsub.f32 %v582, %v630
      %v647 = vsub.f32 %v583, %v631
      %v648 = vsub.f32 %v584, %v632
      %v649 = vmul.f32 %v633, 1.442695
      %v650 = vpow.pop %v649
      %v651 = vmul.f32 %v634, 1.442695
      %v652 = vpow.pop %v651
      %v653 = vmul.f32 %v635, 1.442695
      %v654 = vpow.pop %v653
      %v655 = vmul.f32 %v636, 1.442695
      %v656 = vpow.pop %v655
      %v657 = vmul.f32 %v637, 1.442695
      %v658 = vpow.pop %v657
      %v659 = vmul.f32 %v638, 1.442695
      %v660 = vpow.pop %v659
      %v661 = vmul.f32 %v639, 1.442695
      %v662 = vpow.pop %v661
      %v663 = vmul.f32 %v640, 1.442695
      %v664 = vpow.pop %v663
      %v665 = vmul.f32 %v641, 1.442695
      %v666 = vpow.pop %v665
      %v667 = vmul.f32 %v642, 1.442695
      %v668 = vpow.pop %v667
      %v669 = vmul.f32 %v643, 1.442695
      %v670 = vpow.pop %v669
      %v671 = vmul.f32 %v644, 1.442695
      %v672 = vpow.pop %v671
      %v673 = vmul.f32 %v645, 1.442695
      %v674 = vpow.pop %v673
      %v675 = vmul.f32 %v646, 1.442695
      %v676 = vpow.pop %v675
      %v677 = vmul.f32 %v647, 1.442695
      %v678 = vpow.pop %v677
      %v679 = vmul.f32 %v648, 1.442695
      %v680 = vpow.pop %v679
      %682 = vset.pattern.permute.xlu0 0
      %683 = vperm.xlu0 %682, %v617
      %v684 = vpop.permute.xlu0 %683
      %687 = vset.pattern.permute.xlu0 0
      %688 = vperm.xlu0 %687, %v618
      %v689 = vpop.permute.xlu0 %688
      %692 = vset.pattern.permute.xlu0 0
      %693 = vperm.xlu0 %692, %v619
      %v694 = vpop.permute.xlu0 %693
      %697 = vset.pattern.permute.xlu0 0
      %698 = vperm.xlu0 %697, %v620
      %v699 = vpop.permute.xlu0 %698
      %702 = vset.pattern.permute.xlu0 0
      %703 = vperm.xlu0 %702, %v621
      %v704 = vpop.permute.xlu0 %703
      %707 = vset.pattern.permute.xlu0 0
      %708 = vperm.xlu0 %707, %v622
      %v709 = vpop.permute.xlu0 %708
      %712 = vset.pattern.permute.xlu0 0
      %713 = vperm.xlu0 %712, %v623
      %v714 = vpop.permute.xlu0 %713
      %717 = vset.pattern.permute.xlu0 0
      %718 = vperm.xlu0 %717, %v624
      %v719 = vpop.permute.xlu0 %718
      %722 = vset.pattern.permute.xlu0 0
      %723 = vperm.xlu0 %722, %v625
      %v724 = vpop.permute.xlu0 %723
      %727 = vset.pattern.permute.xlu0 0
      %728 = vperm.xlu0 %727, %v626
      %v729 = vpop.permute.xlu0 %728
      %732 = vset.pattern.permute.xlu0 0
      %733 = vperm.xlu0 %732, %v627
      %v734 = vpop.permute.xlu0 %733
      %737 = vset.pattern.permute.xlu0 0
      %738 = vperm.xlu0 %737, %v628
      %v739 = vpop.permute.xlu0 %738
      %742 = vset.pattern.permute.xlu0 0
      %743 = vperm.xlu0 %742, %v629
      %v744 = vpop.permute.xlu0 %743
      %747 = vset.pattern.permute.xlu0 0
      %748 = vperm.xlu0 %747, %v630
      %v749 = vpop.permute.xlu0 %748
      %752 = vset.pattern.permute.xlu0 0
      %753 = vperm.xlu0 %752, %v631
      %v754 = vpop.permute.xlu0 %753
      %757 = vset.pattern.permute.xlu0 0
      %758 = vperm.xlu0 %757, %v632
      %v759 = vpop.permute.xlu0 %758
      %v761 = vsub.f32 %v522, %v684
      %v762 = vsub.f32 %v525, %v689
      %v763 = vsub.f32 %v528, %v694
      %v764 = vsub.f32 %v531, %v699
      %v765 = vsub.f32 %v534, %v704
      %v766 = vsub.f32 %v537, %v709
      %v767 = vsub.f32 %v540, %v714
      %v768 = vsub.f32 %v543, %v719
      %v769 = vsub.f32 %v546, %v724
      %v770 = vsub.f32 %v549, %v729
      %v771 = vsub.f32 %v552, %v734
      %v772 = vsub.f32 %v555, %v739
      %v773 = vsub.f32 %v558, %v744
      %v774 = vsub.f32 %v561, %v749
      %v775 = vsub.f32 %v564, %v754
      %v776 = vsub.f32 %v567, %v759
      %v777 = vmul.f32 %v761, 1.442695
      %v778 = vpow.pop %v777
      %v779 = vmul.f32 %v762, 1.442695
      %v780 = vpow.pop %v779
      %v781 = vmul.f32 %v763, 1.442695
      %v782 = vpow.pop %v781
      %v783 = vmul.f32 %v764, 1.442695
      %v784 = vpow.pop %v783
      %v785 = vmul.f32 %v765, 1.442695
      %v786 = vpow.pop %v785
      %v787 = vmul.f32 %v766, 1.442695
      %v788 = vpow.pop %v787
      %v789 = vmul.f32 %v767, 1.442695
      %v790 = vpow.pop %v789
      %v791 = vmul.f32 %v768, 1.442695
      %v792 = vpow.pop %v791
      %v793 = vmul.f32 %v769, 1.442695
      %v794 = vpow.pop %v793
      %v795 = vmul.f32 %v770, 1.442695
      %v796 = vpow.pop %v795
      %v797 = vmul.f32 %v771, 1.442695
      %v798 = vpow.pop %v797
      %v799 = vmul.f32 %v772, 1.442695
      %v800 = vpow.pop %v799
      %v801 = vmul.f32 %v773, 1.442695
      %v802 = vpow.pop %v801
      %v803 = vmul.f32 %v774, 1.442695
      %v804 = vpow.pop %v803
      %v805 = vmul.f32 %v775, 1.442695
      %v806 = vpow.pop %v805
      %v807 = vmul.f32 %v776, 1.442695
      %v808 = vpow.pop %v807
      %v809 = vld [vmem:[#allocation3] sm:$0xff]
      %v810 = vld [vmem:[#allocation3 + $0x8] sm:$0xff]
      %v811 = vld [vmem:[#allocation3 + $0x10] sm:$0xff]
      %v812 = vld [vmem:[#allocation3 + $0x18] sm:$0xff]
      %v813 = vld [vmem:[#allocation3 + $0x20] sm:$0xff]
      %v814 = vld [vmem:[#allocation3 + $0x28] sm:$0xff]
      %v815 = vld [vmem:[#allocation3 + $0x30] sm:$0xff]
      %v816 = vld [vmem:[#allocation3 + $0x38] sm:$0xff]
      %v817 = vld [vmem:[#allocation3 + $0x40] sm:$0xff]
      %v818 = vld [vmem:[#allocation3 + $0x48] sm:$0xff]
      %v819 = vld [vmem:[#allocation3 + $0x50] sm:$0xff]
      %v820 = vld [vmem:[#allocation3 + $0x58] sm:$0xff]
      %v821 = vld [vmem:[#allocation3 + $0x60] sm:$0xff]
      %v822 = vld [vmem:[#allocation3 + $0x68] sm:$0xff]
      %v823 = vld [vmem:[#allocation3 + $0x70] sm:$0xff]
      %v824 = vld [vmem:[#allocation3 + $0x78] sm:$0xff]
      %v825 = vmul.f32 %v650, %v809
      %v826 = vmul.f32 %v652, %v810
      %v827 = vmul.f32 %v654, %v811
      %v828 = vmul.f32 %v656, %v812
      %v829 = vmul.f32 %v658, %v813
      %v830 = vmul.f32 %v660, %v814
      %v831 = vmul.f32 %v662, %v815
      %v832 = vmul.f32 %v664, %v816
      %v833 = vmul.f32 %v666, %v817
      %v834 = vmul.f32 %v668, %v818
      %v835 = vmul.f32 %v670, %v819
      %v836 = vmul.f32 %v672, %v820
      %v837 = vmul.f32 %v674, %v821
      %v838 = vmul.f32 %v676, %v822
      %v839 = vmul.f32 %v678, %v823
      %v840 = vmul.f32 %v680, %v824
      %841 = vadd.xlane.f32.xlu0 %v778
      %v842 = vpop.xlane.xlu0 %841
      %843 = vadd.xlane.f32.xlu0 %v780
      %v844 = vpop.xlane.xlu0 %843
      %845 = vadd.xlane.f32.xlu0 %v782
      %v846 = vpop.xlane.xlu0 %845
      %847 = vadd.xlane.f32.xlu0 %v784
      %v848 = vpop.xlane.xlu0 %847
      %849 = vadd.xlane.f32.xlu0 %v786
      %v850 = vpop.xlane.xlu0 %849
      %851 = vadd.xlane.f32.xlu0 %v788
      %v852 = vpop.xlane.xlu0 %851
      %853 = vadd.xlane.f32.xlu0 %v790
      %v854 = vpop.xlane.xlu0 %853
      %855 = vadd.xlane.f32.xlu0 %v792
      %v856 = vpop.xlane.xlu0 %855
      %857 = vadd.xlane.f32.xlu0 %v794
      %v858 = vpop.xlane.xlu0 %857
      %859 = vadd.xlane.f32.xlu0 %v796
      %v860 = vpop.xlane.xlu0 %859
      %861 = vadd.xlane.f32.xlu0 %v798
      %v862 = vpop.xlane.xlu0 %861
      %863 = vadd.xlane.f32.xlu0 %v800
      %v864 = vpop.xlane.xlu0 %863
      %865 = vadd.xlane.f32.xlu0 %v802
      %v866 = vpop.xlane.xlu0 %865
      %867 = vadd.xlane.f32.xlu0 %v804
      %v868 = vpop.xlane.xlu0 %867
      %869 = vadd.xlane.f32.xlu0 %v806
      %v870 = vpop.xlane.xlu0 %869
      %871 = vadd.xlane.f32.xlu0 %v808
      %v872 = vpop.xlane.xlu0 %871
      %v873 = vadd.f32 %v825, %v842
      %v874 = vadd.f32 %v826, %v844
      %v875 = vadd.f32 %v827, %v846
      %v876 = vadd.f32 %v828, %v848
      %v877 = vadd.f32 %v829, %v850
      %v878 = vadd.f32 %v830, %v852
      %v879 = vadd.f32 %v831, %v854
      %v880 = vadd.f32 %v832, %v856
      %v881 = vadd.f32 %v833, %v858
      %v882 = vadd.f32 %v834, %v860
      %v883 = vadd.f32 %v835, %v862
      %v884 = vadd.f32 %v836, %v864
      %v885 = vadd.f32 %v837, %v866
      %v886 = vadd.f32 %v838, %v868
      %v887 = vadd.f32 %v839, %v870
      %v888 = vadd.f32 %v840, %v872
      %vm889 = vcmask 7168
      %890 = vst.msk [vmem:[#allocation3] sm:$0xff] %vm889, %v873
      %891 = vst.msk [vmem:[#allocation3 + $0x8] sm:$0xff] %vm889, %v874
      %892 = vst.msk [vmem:[#allocation3 + $0x10] sm:$0xff] %vm889, %v875
      %893 = vst.msk [vmem:[#allocation3 + $0x18] sm:$0xff] %vm889, %v876
      %894 = vst.msk [vmem:[#allocation3 + $0x20] sm:$0xff] %vm889, %v877
      %895 = vst.msk [vmem:[#allocation3 + $0x28] sm:$0xff] %vm889, %v878
      %896 = vst.msk [vmem:[#allocation3 + $0x30] sm:$0xff] %vm889, %v879
      %897 = vst.msk [vmem:[#allocation3 + $0x38] sm:$0xff] %vm889, %v880
      %898 = vst.msk [vmem:[#allocation3 + $0x40] sm:$0xff] %vm889, %v881
      %899 = vst.msk [vmem:[#allocation3 + $0x48] sm:$0xff] %vm889, %v882
      %900 = vst.msk [vmem:[#allocation3 + $0x50] sm:$0xff] %vm889, %v883
      %901 = vst.msk [vmem:[#allocation3 + $0x58] sm:$0xff] %vm889, %v884
      %902 = vst.msk [vmem:[#allocation3 + $0x60] sm:$0xff] %vm889, %v885
      %903 = vst.msk [vmem:[#allocation3 + $0x68] sm:$0xff] %vm889, %v886
      %904 = vst.msk [vmem:[#allocation3 + $0x70] sm:$0xff] %vm889, %v887
      %905 = vst.msk [vmem:[#allocation3 + $0x78] sm:$0xff] %vm889, %v888
      %v906 = vld [vmem:[#allocation4] sm:$0xff]
      %v907 = vld [vmem:[#allocation4 + $0x8] sm:$0xff]
      %v908 = vld [vmem:[#allocation4 + $0x10] sm:$0xff]
      %v909 = vld [vmem:[#allocation4 + $0x18] sm:$0xff]
      %v910 = vld [vmem:[#allocation4 + $0x20] sm:$0xff]
      %v911 = vld [vmem:[#allocation4 + $0x28] sm:$0xff]
      %v912 = vld [vmem:[#allocation4 + $0x30] sm:$0xff]
      %v913 = vld [vmem:[#allocation4 + $0x38] sm:$0xff]
      %v914 = vld [vmem:[#allocation4 + $0x40] sm:$0xff]
      %v915 = vld [vmem:[#allocation4 + $0x48] sm:$0xff]
      %v916 = vld [vmem:[#allocation4 + $0x50] sm:$0xff]
      %v917 = vld [vmem:[#allocation4 + $0x58] sm:$0xff]
      %v918 = vld [vmem:[#allocation4 + $0x60] sm:$0xff]
      %v919 = vld [vmem:[#allocation4 + $0x68] sm:$0xff]
      %v920 = vld [vmem:[#allocation4 + $0x70] sm:$0xff]
      %v921 = vld [vmem:[#allocation4 + $0x78] sm:$0xff]
      %923 = vset.pattern.permute.xlu0 0
      %924 = vperm.xlu0 %923, %v650
      %v925 = vpop.permute.xlu0 %924
      %928 = vset.pattern.permute.xlu0 0
      %929 = vperm.xlu0 %928, %v652
      %v930 = vpop.permute.xlu0 %929
      %933 = vset.pattern.permute.xlu0 0
      %934 = vperm.xlu0 %933, %v654
      %v935 = vpop.permute.xlu0 %934
      %938 = vset.pattern.permute.xlu0 0
      %939 = vperm.xlu0 %938, %v656
      %v940 = vpop.permute.xlu0 %939
      %943 = vset.pattern.permute.xlu0 0
      %944 = vperm.xlu0 %943, %v658
      %v945 = vpop.permute.xlu0 %944
      %948 = vset.pattern.permute.xlu0 0
      %949 = vperm.xlu0 %948, %v660
      %v950 = vpop.permute.xlu0 %949
      %953 = vset.pattern.permute.xlu0 0
      %954 = vperm.xlu0 %953, %v662
      %v955 = vpop.permute.xlu0 %954
      %958 = vset.pattern.permute.xlu0 0
      %959 = vperm.xlu0 %958, %v664
      %v960 = vpop.permute.xlu0 %959
      %963 = vset.pattern.permute.xlu0 0
      %964 = vperm.xlu0 %963, %v666
      %v965 = vpop.permute.xlu0 %964
      %968 = vset.pattern.permute.xlu0 0
      %969 = vperm.xlu0 %968, %v668
      %v970 = vpop.permute.xlu0 %969
      %973 = vset.pattern.permute.xlu0 0
      %974 = vperm.xlu0 %973, %v670
      %v975 = vpop.permute.xlu0 %974
      %978 = vset.pattern.permute.xlu0 0
      %979 = vperm.xlu0 %978, %v672
      %v980 = vpop.permute.xlu0 %979
      %983 = vset.pattern.permute.xlu0 0
      %984 = vperm.xlu0 %983, %v674
      %v985 = vpop.permute.xlu0 %984
      %988 = vset.pattern.permute.xlu0 0
      %989 = vperm.xlu0 %988, %v676
      %v990 = vpop.permute.xlu0 %989
      %993 = vset.pattern.permute.xlu0 0
      %994 = vperm.xlu0 %993, %v678
      %v995 = vpop.permute.xlu0 %994
      %998 = vset.pattern.permute.xlu0 0
      %999 = vperm.xlu0 %998, %v680
      %v1000 = vpop.permute.xlu0 %999
      %v1002 = vmul.f32 %v925, %v906
      %v1003 = vmul.f32 %v930, %v907
      %v1004 = vmul.f32 %v935, %v908
      %v1005 = vmul.f32 %v940, %v909
      %v1006 = vmul.f32 %v945, %v910
      %v1007 = vmul.f32 %v950, %v911
      %v1008 = vmul.f32 %v955, %v912
      %v1009 = vmul.f32 %v960, %v913
      %v1010 = vmul.f32 %v965, %v914
      %v1011 = vmul.f32 %v970, %v915
      %v1012 = vmul.f32 %v975, %v916
      %v1013 = vmul.f32 %v980, %v917
      %v1014 = vmul.f32 %v985, %v918
      %v1015 = vmul.f32 %v990, %v919
      %v1016 = vmul.f32 %v995, %v920
      %v1017 = vmul.f32 %v1000, %v921
      %1018 = vmatpush.msra.mxu0 %v406
      %1019 = vmatpush.msra.mxu0 %v405
      %1020 = vmatpush.msra.mxu0 %v404
      %1021 = vmatpush.msra.mxu0 %v403
      %1022 = vmatpush.msra.mxu0 %v402
      %1023 = vmatpush.msra.mxu0 %v401
      %1024 = vmatpush.msra.mxu0 %v400
      %1025 = vmatpush.msra.mxu0 %v399
      %1026 = vmatpush.msra.mxu0 %v398
      %1027 = vmatpush.msra.mxu0 %v397
      %1028 = vmatpush.msra.mxu0 %v396
      %1029 = vmatpush.msra.mxu0 %v395
      %1030 = vmatpush.msra.mxu0 %v394
      %1031 = vmatpush.msra.mxu0 %v393
      %1032 = vmatpush.msra.mxu0 %v392
      %1033 = vmatpush.msra.mxu0 %v391
      %1034 = vmatmul.f32.gmra.mxu0 %v778
      %v1035 = vpop.f32.mrf.mxu0
      %v1036 = vadd.f32 0.0, %v1035
      %1037 = vmatmul.f32.gmra.mxu0 %v780
      %v1038 = vpop.f32.mrf.mxu0
      %v1039 = vadd.f32 0.0, %v1038
      %1040 = vmatmul.f32.gmra.mxu0 %v782
      %v1041 = vpop.f32.mrf.mxu0
      %v1042 = vadd.f32 0.0, %v1041
      %1043 = vmatmul.f32.gmra.mxu0 %v784
      %v1044 = vpop.f32.mrf.mxu0
      %v1045 = vadd.f32 0.0, %v1044
      %1046 = vmatmul.f32.gmra.mxu0 %v786
      %v1047 = vpop.f32.mrf.mxu0
      %v1048 = vadd.f32 0.0, %v1047
      %1049 = vmatmul.f32.gmra.mxu0 %v788
      %v1050 = vpop.f32.mrf.mxu0
      %v1051 = vadd.f32 0.0, %v1050
      %1052 = vmatmul.f32.gmra.mxu0 %v790
      %v1053 = vpop.f32.mrf.mxu0
      %v1054 = vadd.f32 0.0, %v1053
      %1055 = vmatmul.f32.gmra.mxu0 %v792
      %v1056 = vpop.f32.mrf.mxu0
      %v1057 = vadd.f32 0.0, %v1056
      %1058 = vmatmul.f32.gmra.mxu0 %v794
      %v1059 = vpop.f32.mrf.mxu0
      %v1060 = vadd.f32 0.0, %v1059
      %1061 = vmatmul.f32.gmra.mxu0 %v796
      %v1062 = vpop.f32.mrf.mxu0
      %v1063 = vadd.f32 0.0, %v1062
      %1064 = vmatmul.f32.gmra.mxu0 %v798
      %v1065 = vpop.f32.mrf.mxu0
      %v1066 = vadd.f32 0.0, %v1065
      %1067 = vmatmul.f32.gmra.mxu0 %v800
      %v1068 = vpop.f32.mrf.mxu0
      %v1069 = vadd.f32 0.0, %v1068
      %1070 = vmatmul.f32.gmra.mxu0 %v802
      %v1071 = vpop.f32.mrf.mxu0
      %v1072 = vadd.f32 0.0, %v1071
      %1073 = vmatmul.f32.gmra.mxu0 %v804
      %v1074 = vpop.f32.mrf.mxu0
      %v1075 = vadd.f32 0.0, %v1074
      %1076 = vmatmul.f32.gmra.mxu0 %v806
      %v1077 = vpop.f32.mrf.mxu0
      %v1078 = vadd.f32 0.0, %v1077
      %1079 = vmatmul.f32.gmra.mxu0 %v808
      %v1080 = vpop.f32.mrf.mxu0
      %v1081 = vadd.f32 0.0, %v1080
      %1082 = vdwg.mxu0
      %v1083 = vadd.f32 %v1002, %v1036
      %v1084 = vadd.f32 %v1003, %v1039
      %v1085 = vadd.f32 %v1004, %v1042
      %v1086 = vadd.f32 %v1005, %v1045
      %v1087 = vadd.f32 %v1006, %v1048
      %v1088 = vadd.f32 %v1007, %v1051
      %v1089 = vadd.f32 %v1008, %v1054
      %v1090 = vadd.f32 %v1009, %v1057
      %v1091 = vadd.f32 %v1010, %v1060
      %v1092 = vadd.f32 %v1011, %v1063
      %v1093 = vadd.f32 %v1012, %v1066
      %v1094 = vadd.f32 %v1013, %v1069
      %v1095 = vadd.f32 %v1014, %v1072
      %v1096 = vadd.f32 %v1015, %v1075
      %v1097 = vadd.f32 %v1016, %v1078
      %v1098 = vadd.f32 %v1017, %v1081
      %1099 = vst.msk [vmem:[#allocation4] sm:$0xff] %vm407, %v1083
      %1100 = vst.msk [vmem:[#allocation4 + $0x8] sm:$0xff] %vm407, %v1084
      %1101 = vst.msk [vmem:[#allocation4 + $0x10] sm:$0xff] %vm407, %v1085
      %1102 = vst.msk [vmem:[#allocation4 + $0x18] sm:$0xff] %vm407, %v1086
      %1103 = vst.msk [vmem:[#allocation4 + $0x20] sm:$0xff] %vm407, %v1087
      %1104 = vst.msk [vmem:[#allocation4 + $0x28] sm:$0xff] %vm407, %v1088
      %1105 = vst.msk [vmem:[#allocation4 + $0x30] sm:$0xff] %vm407, %v1089
      %1106 = vst.msk [vmem:[#allocation4 + $0x38] sm:$0xff] %vm407, %v1090
      %1107 = vst.msk [vmem:[#allocation4 + $0x40] sm:$0xff] %vm407, %v1091
      %1108 = vst.msk [vmem:[#allocation4 + $0x48] sm:$0xff] %vm407, %v1092
      %1109 = vst.msk [vmem:[#allocation4 + $0x50] sm:$0xff] %vm407, %v1093
      %1110 = vst.msk [vmem:[#allocation4 + $0x58] sm:$0xff] %vm407, %v1094
      %1111 = vst.msk [vmem:[#allocation4 + $0x60] sm:$0xff] %vm407, %v1095
      %1112 = vst.msk [vmem:[#allocation4 + $0x68] sm:$0xff] %vm407, %v1096
      %1113 = vst.msk [vmem:[#allocation4 + $0x70] sm:$0xff] %vm407, %v1097
      %1114 = vst.msk [vmem:[#allocation4 + $0x78] sm:$0xff] %vm407, %v1098
      %1115 = vst.msk [vmem:[#allocation2] sm:$0xff] %vm889, %v617
      %1116 = vst.msk [vmem:[#allocation2 + $0x8] sm:$0xff] %vm889, %v618
      %1117 = vst.msk [vmem:[#allocation2 + $0x10] sm:$0xff] %vm889, %v619
      %1118 = vst.msk [vmem:[#allocation2 + $0x18] sm:$0xff] %vm889, %v620
      %1119 = vst.msk [vmem:[#allocation2 + $0x20] sm:$0xff] %vm889, %v621
      %1120 = vst.msk [vmem:[#allocation2 + $0x28] sm:$0xff] %vm889, %v622
      %1121 = vst.msk [vmem:[#allocation2 + $0x30] sm:$0xff] %vm889, %v623
      %1122 = vst.msk [vmem:[#allocation2 + $0x38] sm:$0xff] %vm889, %v624
      %1123 = vst.msk [vmem:[#allocation2 + $0x40] sm:$0xff] %vm889, %v625
      %1124 = vst.msk [vmem:[#allocation2 + $0x48] sm:$0xff] %vm889, %v626
      %1125 = vst.msk [vmem:[#allocation2 + $0x50] sm:$0xff] %vm889, %v627
      %1126 = vst.msk [vmem:[#allocation2 + $0x58] sm:$0xff] %vm889, %v628
      %1127 = vst.msk [vmem:[#allocation2 + $0x60] sm:$0xff] %vm889, %v629
      %1128 = vst.msk [vmem:[#allocation2 + $0x68] sm:$0xff] %vm889, %v630
      %1129 = vst.msk [vmem:[#allocation2 + $0x70] sm:$0xff] %vm889, %v631
      %1130 = vst.msk [vmem:[#allocation2 + $0x78] sm:$0xff] %vm889, %v632
      // Predicated region
      $region37: #{tpu_custom_call.1} parent=31 // pred_check
        %p1131 = pneg %p289
      $region38: #{tpu_custom_call.1} parent=31 // pred_check_branch
        %1133 = sbr.rel (%p1131) target = $region40
      $region39: #{tpu_custom_call.1} parent=31 // pred_region
        %v1134 = vld [vmem:[#allocation3] sm:$0xff]
        %v1135 = vld [vmem:[#allocation3 + $0x8] sm:$0xff]
        %v1136 = vld [vmem:[#allocation3 + $0x10] sm:$0xff]
        %v1137 = vld [vmem:[#allocation3 + $0x18] sm:$0xff]
        %v1138 = vld [vmem:[#allocation3 + $0x20] sm:$0xff]
        %v1139 = vld [vmem:[#allocation3 + $0x28] sm:$0xff]
        %v1140 = vld [vmem:[#allocation3 + $0x30] sm:$0xff]
        %v1141 = vld [vmem:[#allocation3 + $0x38] sm:$0xff]
        %v1142 = vld [vmem:[#allocation3 + $0x40] sm:$0xff]
        %v1143 = vld [vmem:[#allocation3 + $0x48] sm:$0xff]
        %v1144 = vld [vmem:[#allocation3 + $0x50] sm:$0xff]
        %v1145 = vld [vmem:[#allocation3 + $0x58] sm:$0xff]
        %v1146 = vld [vmem:[#allocation3 + $0x60] sm:$0xff]
        %v1147 = vld [vmem:[#allocation3 + $0x68] sm:$0xff]
        %v1148 = vld [vmem:[#allocation3 + $0x70] sm:$0xff]
        %v1149 = vld [vmem:[#allocation3 + $0x78] sm:$0xff]
        %v1150 = vrcp.pop %v1134
        %v1151 = vrcp.pop %v1135
        %v1152 = vrcp.pop %v1136
        %v1153 = vrcp.pop %v1137
        %v1154 = vrcp.pop %v1138
        %v1155 = vrcp.pop %v1139
        %v1156 = vrcp.pop %v1140
        %v1157 = vrcp.pop %v1141
        %v1158 = vrcp.pop %v1142
        %v1159 = vrcp.pop %v1143
        %v1160 = vrcp.pop %v1144
        %v1161 = vrcp.pop %v1145
        %v1162 = vrcp.pop %v1146
        %v1163 = vrcp.pop %v1147
        %v1164 = vrcp.pop %v1148
        %v1165 = vrcp.pop %v1149
        %v1166 = vld [vmem:[#allocation4] sm:$0xff]
        %v1167 = vld [vmem:[#allocation4 + $0x8] sm:$0xff]
        %v1168 = vld [vmem:[#allocation4 + $0x10] sm:$0xff]
        %v1169 = vld [vmem:[#allocation4 + $0x18] sm:$0xff]
        %v1170 = vld [vmem:[#allocation4 + $0x20] sm:$0xff]
        %v1171 = vld [vmem:[#allocation4 + $0x28] sm:$0xff]
        %v1172 = vld [vmem:[#allocation4 + $0x30] sm:$0xff]
        %v1173 = vld [vmem:[#allocation4 + $0x38] sm:$0xff]
        %v1174 = vld [vmem:[#allocation4 + $0x40] sm:$0xff]
        %v1175 = vld [vmem:[#allocation4 + $0x48] sm:$0xff]
        %v1176 = vld [vmem:[#allocation4 + $0x50] sm:$0xff]
        %v1177 = vld [vmem:[#allocation4 + $0x58] sm:$0xff]
        %v1178 = vld [vmem:[#allocation4 + $0x60] sm:$0xff]
        %v1179 = vld [vmem:[#allocation4 + $0x68] sm:$0xff]
        %v1180 = vld [vmem:[#allocation4 + $0x70] sm:$0xff]
        %v1181 = vld [vmem:[#allocation4 + $0x78] sm:$0xff]
        %1183 = vset.pattern.permute.xlu0 0
        %1184 = vperm.xlu0 %1183, %v1150
        %v1185 = vpop.permute.xlu0 %1184
        %1188 = vset.pattern.permute.xlu0 0
        %1189 = vperm.xlu0 %1188, %v1151
        %v1190 = vpop.permute.xlu0 %1189
        %1193 = vset.pattern.permute.xlu0 0
        %1194 = vperm.xlu0 %1193, %v1152
        %v1195 = vpop.permute.xlu0 %1194
        %1198 = vset.pattern.permute.xlu0 0
        %1199 = vperm.xlu0 %1198, %v1153
        %v1200 = vpop.permute.xlu0 %1199
        %1203 = vset.pattern.permute.xlu0 0
        %1204 = vperm.xlu0 %1203, %v1154
        %v1205 = vpop.permute.xlu0 %1204
        %1208 = vset.pattern.permute.xlu0 0
        %1209 = vperm.xlu0 %1208, %v1155
        %v1210 = vpop.permute.xlu0 %1209
        %1213 = vset.pattern.permute.xlu0 0
        %1214 = vperm.xlu0 %1213, %v1156
        %v1215 = vpop.permute.xlu0 %1214
        %1218 = vset.pattern.permute.xlu0 0
        %1219 = vperm.xlu0 %1218, %v1157
        %v1220 = vpop.permute.xlu0 %1219
        %1223 = vset.pattern.permute.xlu0 0
        %1224 = vperm.xlu0 %1223, %v1158
        %v1225 = vpop.permute.xlu0 %1224
        %1228 = vset.pattern.permute.xlu0 0
        %1229 = vperm.xlu0 %1228, %v1159
        %v1230 = vpop.permute.xlu0 %1229
        %1233 = vset.pattern.permute.xlu0 0
        %1234 = vperm.xlu0 %1233, %v1160
        %v1235 = vpop.permute.xlu0 %1234
        %1238 = vset.pattern.permute.xlu0 0
        %1239 = vperm.xlu0 %1238, %v1161
        %v1240 = vpop.permute.xlu0 %1239
        %1243 = vset.pattern.permute.xlu0 0
        %1244 = vperm.xlu0 %1243, %v1162
        %v1245 = vpop.permute.xlu0 %1244
        %1248 = vset.pattern.permute.xlu0 0
        %1249 = vperm.xlu0 %1248, %v1163
        %v1250 = vpop.permute.xlu0 %1249
        %1253 = vset.pattern.permute.xlu0 0
        %1254 = vperm.xlu0 %1253, %v1164
        %v1255 = vpop.permute.xlu0 %1254
        %1258 = vset.pattern.permute.xlu0 0
        %1259 = vperm.xlu0 %1258, %v1165
        %v1260 = vpop.permute.xlu0 %1259
        %v1262 = vmul.f32 %v1166, %v1185
        %v1263 = vmul.f32 %v1167, %v1190
        %v1264 = vmul.f32 %v1168, %v1195
        %v1265 = vmul.f32 %v1169, %v1200
        %v1266 = vmul.f32 %v1170, %v1205
        %v1267 = vmul.f32 %v1171, %v1210
        %v1268 = vmul.f32 %v1172, %v1215
        %v1269 = vmul.f32 %v1173, %v1220
        %v1270 = vmul.f32 %v1174, %v1225
        %v1271 = vmul.f32 %v1175, %v1230
        %v1272 = vmul.f32 %v1176, %v1235
        %v1273 = vmul.f32 %v1177, %v1240
        %v1274 = vmul.f32 %v1178, %v1245
        %v1275 = vmul.f32 %v1179, %v1250
        %v1276 = vmul.f32 %v1180, %v1255
        %v1277 = vmul.f32 %v1181, %v1260
        %1278 = vst.msk [vmem:[%s287] sm:$0xff] %vm407, %v1262
        %1279 = vst.msk [vmem:[%s287 + $0x8] sm:$0xff] %vm407, %v1263
        %1280 = vst.msk [vmem:[%s287 + $0x10] sm:$0xff] %vm407, %v1264
        %1281 = vst.msk [vmem:[%s287 + $0x18] sm:$0xff] %vm407, %v1265
        %1282 = vst.msk [vmem:[%s287 + $0x20] sm:$0xff] %vm407, %v1266
        %1283 = vst.msk [vmem:[%s287 + $0x28] sm:$0xff] %vm407, %v1267
        %1284 = vst.msk [vmem:[%s287 + $0x30] sm:$0xff] %vm407, %v1268
        %1285 = vst.msk [vmem:[%s287 + $0x38] sm:$0xff] %vm407, %v1269
        %1286 = vst.msk [vmem:[%s287 + $0x40] sm:$0xff] %vm407, %v1270
        %1287 = vst.msk [vmem:[%s287 + $0x48] sm:$0xff] %vm407, %v1271
        %1288 = vst.msk [vmem:[%s287 + $0x50] sm:$0xff] %vm407, %v1272
        %1289 = vst.msk [vmem:[%s287 + $0x58] sm:$0xff] %vm407, %v1273
        %1290 = vst.msk [vmem:[%s287 + $0x60] sm:$0xff] %vm407, %v1274
        %1291 = vst.msk [vmem:[%s287 + $0x68] sm:$0xff] %vm407, %v1275
        %1292 = vst.msk [vmem:[%s287 + $0x70] sm:$0xff] %vm407, %v1276
        %1293 = vst.msk [vmem:[%s287 + $0x78] sm:$0xff] %vm407, %v1277
      $region40: #{tpu_custom_call.1} parent=31 // pred_fallthru
        _
      %s1294 = smul.u32 16, %s20
      %p1295 = scmp.lt.s32.totalorder %s19, 7
      %s1296 = scalar_select %p1295, %s19, 7
      %p1297 = scmp.lt.s32.totalorder %s1294, 15
      %s1298 = scalar_select %p1297, %s1294, 15
      %s1299 = smul.addr %s1296, 16
      %s1300 = sadd.s32 %s1298, %s1299
      %s1301 = smul.addr %s1300, 8
      %s1302 = scalar_lea.vmem %s3, %s1301
      // Predicated region
      $region41: #{tpu_custom_call.1} parent=31 // pred_check
        %p1303 = pneg %p137
      $region42: #{tpu_custom_call.1} parent=31 // pred_check_branch
        %1305 = sbr.rel (%p1303) target = $region44
      $region43: #{tpu_custom_call.1} parent=31 // pred_region
        %s1306 = smul.u32 16, %s20
      $region44: #{tpu_custom_call.1} parent=31 // pred_fallthru
        _
    $region32: #{tpu_custom_call.1} parent=5 // pred_fallthru
      _
    %p1307 = scmp.le.s32.totalorder 2, %s9
    // Predicated region
    $region45: #{tpu_custom_call.1} parent=5 // pred_check
      %p1308 = pneg %p1307
    $region46: #{tpu_custom_call.1} parent=5 // pred_check_branch
      %1310 = sbr.rel (%p1308) target = $region48
    $region47: #{tpu_custom_call.1} parent=5 // pred_region
      %s1311 = ssub.s32 %s9, 2
      // Predicated region
      $region49: #{tpu_custom_call.1} parent=47 // pred_check
        %p1312 = pneg %p143
      $region50: #{tpu_custom_call.1} parent=47 // pred_check_branch
        %1314 = sbr.rel (%p1312) target = $region52
      $region51: #{tpu_custom_call.1} parent=47 // pred_region
        %s1315 = smul.u32 16, %s23
        %p1316 = scmp.lt.s32.totalorder %s22, 7
        %s1317 = scalar_select %p1316, %s22, 7
        %p1318 = scmp.lt.s32.totalorder %s1315, 15
        %s1319 = scalar_select %p1318, %s1315, 15
        %s1320 = smul.addr %s1317, 16
        %s1321 = sadd.s32 %s1319, %s1320
        %s1322 = smul.addr %s1321, 8
        %s1323 = scalar_lea.vmem %s3, %s1322
      $region52: #{tpu_custom_call.1} parent=47 // pred_fallthru
        _
    $region48: #{tpu_custom_call.1} parent=5 // pred_fallthru
      _
  $region6: #{tpu_custom_call.1} parent=0 // loop_footer
    %s13 = sadd.s32 1, %s9
  $region7: #{tpu_custom_call.1} parent=0 // loop_footer_branch
    %8 = sbr.rel target = $region3
  $region8: #{tpu_custom_call.1} parent=0 // loop_exit
    _

</llo_original>
